<compile_context>
chip_gen: v6e
topology: v6e:2x2x1
jax: 0.10.0
libtpu: 0.0.40
codegen_flags: <defaults>
</compile_context>

<pallas_src>
import math

import jax
import jax.numpy as jnp
from jax.experimental import pallas as pl
from jax.experimental.pallas import tpu as pltpu


def _build_pe_table(n_filters: int, max_len: int) -> jnp.ndarray:
    """Deterministic sinusoidal table, identical to the PyTorch __init__."""
    position = jnp.arange(max_len, dtype=jnp.float32)[:, None]            # (max_len, 1)
    div_term = jnp.exp(
        jnp.arange(0, n_filters, 2, dtype=jnp.float32)
        * (-math.log(10000.0) / n_filters)
    )                                                                      # (ceil(D/2),)
    pe = jnp.zeros((max_len, n_filters), dtype=jnp.float32)
    pe = pe.at[:, 0::2].set(jnp.sin(position * div_term))
    pe = pe.at[:, 1::2].set(jnp.cos(position * div_term)[:, : n_filters // 2])
    return pe


# Target ~2 MiB per x block: with double-buffered input + output + resident pe
# that is ~8-10 MiB live VMEM, safely inside the default scoped-VMEM limit on
# v5e (16 MiB), v6e (32 MiB) and v7x (32 MiB scoped / 64 MiB physical).
_TARGET_BLOCK_BYTES = 2 << 20


def _pe_add_2d_kernel(x_ref, pe_ref, o_ref):
    # x_ref: (Bt, Ct), pe_ref: (1, Ct) -> broadcast add over rows, lane-dense store.
    o_ref[...] = (x_ref[...] + pe_ref[...]).astype(o_ref.dtype)


def _pe_add_3d_kernel(x_ref, pe_ref, o_ref):
    # x_ref: (Bt, Lt, D), pe_ref: (Lt, D) -> broadcast add over the batch dim.
    o_ref[...] = (x_ref[...] + pe_ref[...]).astype(o_ref.dtype)


def _lane_flat_forward(x_flat, pe, Bf, L, D):
    """Path for D not a multiple of 128: flatten (L, D) into one lane-dense axis."""
    C = L * D
    itemsize = x_flat.dtype.itemsize
    elems_budget = max(1, _TARGET_BLOCK_BYTES // itemsize)
    if C % 128 == 0:
        Ct = min(C, max(128, (elems_budget // 128) * 128))
    else:
        # Block last dim must be a multiple of 128 OR the full extent.
        Ct = C
    rows_budget = max(1, elems_budget // Ct)
    Bt = Bf if rows_budget >= Bf else max(8, (rows_budget // 8) * 8)

    x2 = x_flat.reshape(Bf, C)            # contiguous reshape, pure layout plumbing
    pe2 = pe.reshape(1, C)
    # Column axis outer, batch axis inner -> pe block index constant over the
    # inner sweep, so the table stays resident in VMEM.
    grid = (pl.cdiv(C, Ct), pl.cdiv(Bf, Bt))

    out = pl.pallas_call(
        _pe_add_2d_kernel,
        out_shape=jax.ShapeDtypeStruct((Bf, C), x_flat.dtype),
        grid_spec=pltpu.PrefetchScalarGridSpec(
            num_scalar_prefetch=0,
            grid=grid,
            in_specs=[
                pl.BlockSpec((Bt, Ct), lambda c, b: (b, c)),
                pl.BlockSpec((1, Ct), lambda c, b: (0, c)),
            ],
            out_specs=pl.BlockSpec((Bt, Ct), lambda c, b: (b, c)),
        ),
        compiler_params=pltpu.CompilerParams(
            dimension_semantics=("parallel", "parallel"),
        ),
        cost_estimate=pl.CostEstimate(
            flops=Bf * C,
            transcendentals=0,
            bytes_accessed=(2 * Bf * C + C) * itemsize,
        ),
    )(x2, pe2)
    return out.reshape(Bf, L, D)


def _lane_dense_forward(x_flat, pe, Bf, L, D):
    """Path for D a multiple of 128: keep (B, L, D), tile batch and L."""
    itemsize = x_flat.dtype.itemsize
    elems_budget = max(1, _TARGET_BLOCK_BYTES // itemsize)
    rows_budget = max(1, elems_budget // D)          # rows here means Bt * Lt
    Lt = L if rows_budget >= L else max(8, (rows_budget // 8) * 8)
    Bt = min(Bf, max(1, rows_budget // Lt))

    # L axis outer, batch axis inner -> pe block resident across the batch sweep.
    grid = (pl.cdiv(L, Lt), pl.cdiv(Bf, Bt))

    out = pl.pallas_call(
        _pe_add_3d_kernel,
        out_shape=jax.ShapeDtypeStruct((Bf, L, D), x_flat.dtype),
        grid_spec=pltpu.PrefetchScalarGridSpec(
            num_scalar_prefetch=0,
            grid=grid,
            in_specs=[
                pl.BlockSpec((Bt, Lt, D), lambda l, b: (b, l, 0)),
                pl.BlockSpec((Lt, D), lambda l, b: (l, 0)),
            ],
            out_specs=pl.BlockSpec((Bt, Lt, D), lambda l, b: (b, l, 0)),
        ),
        compiler_params=pltpu.CompilerParams(
            dimension_semantics=("parallel", "parallel"),
        ),
        cost_estimate=pl.CostEstimate(
            flops=Bf * L * D,
            transcendentals=0,
            bytes_accessed=(2 * Bf * L * D + L * D) * itemsize,
        ),
    )(x_flat, pe)
    return out


def position_encoding_forward(x: jnp.ndarray, pe_table: jnp.ndarray) -> jnp.ndarray:
    """Adds sinusoidal positional encoding to x of shape (*, L, D)."""
    *lead, L, D = x.shape
    assert D == pe_table.shape[1], "hidden size mismatch with pe table"
    assert L <= pe_table.shape[0], "sequence length exceeds max_len"

    # Carry the table in the activation dtype (halves pe DMA/VMEM for bf16,
    # avoids f32-result-into-bf16-ref store hazards).
    pe = pe_table[:L, :].astype(x.dtype)

    Bf = 1
    for d in lead:
        Bf *= d
    x_flat = x.reshape(Bf, L, D)

    if D % 128 == 0:
        out = _lane_dense_forward(x_flat, pe, Bf, L, D)
    else:
        out = _lane_flat_forward(x_flat, pe, Bf, L, D)

    return out.reshape(*lead, L, D)


if __name__ == "__main__":
    key = jax.random.PRNGKey(0)
    k1, k2, k3, k4 = jax.random.split(key, 4)

    # --- Path A: D < 128 (lane-flattened layout), f32, 3-D input ---
    n_filters, max_len, batch, seq = 32, 16, 2, 8
    pe32 = _build_pe_table(n_filters, max_len)
    x = jax.random.normal(k1, (batch, seq, n_filters), dtype=jnp.float32)
    out = jax.block_until_ready(position_encoding_forward(x, pe32))
    ref = x + pe32[:seq][None, :, :]
    assert out.shape == x.shape
    assert jnp.allclose(out, ref, atol=1e-6), "mismatch vs reference (3D, f32)"

    # --- 4-D input, like the docstring example (*, L, D) ---
    x4 = jax.random.normal(k2, (2, 3, seq, n_filters), dtype=jnp.float32)
    out4 = jax.block_until_ready(position_encoding_forward(x4, pe32))
    ref4 = x4 + pe32[:seq][None, None, :, :]
    assert out4.shape == x4.shape
    assert jnp.allclose(out4, ref4, atol=1e-6), "mismatch vs reference (4D, f32)"

    # --- bf16 activations: pe carried in bf16, explicit cast on the store ---
    xb = jax.random.normal(k3, (batch, seq, n_filters), dtype=jnp.float32).astype(jnp.bfloat16)
    outb = jax.block_until_ready(position_encoding_forward(xb, pe32))
    refb = xb + pe32[:seq].astype(jnp.bfloat16)[None, :, :]
    assert jnp.allclose(outb.astype(jnp.float32), refb.astype(jnp.float32),
                        atol=2e-2, rtol=2e-2), "mismatch vs reference (bf16)"

    # --- Path B: D multiple of 128 keeps the natural (B, L, D) layout ---
    pe128 = _build_pe_table(128, max_len)
    xc = jax.random.normal(k4, (batch, seq, 128), dtype=jnp.float32)
    outc = jax.block_until_ready(position_encoding_forward(xc, pe128))
    refc = xc + pe128[:seq][None, :, :]
    assert jnp.allclose(outc, refc, atol=1e-6), "mismatch vs reference (D=128)"

    print("KERNEL_OK")
</pallas_src>

<mosaic_0001>
module attributes {stable_mosaic.version = 11 : i64} {
  func.func @_pe_add_2d_kernel(%arg0: i32, %arg1: i32, %arg2: memref<2x256xf32, #tpu.memory_space<vmem>>, %arg3: memref<1x256xf32, #tpu.memory_space<vmem>>, %arg4: memref<2x256xf32, #tpu.memory_space<vmem>>) attributes {dimension_semantics = [#tpu.dimension_semantics<parallel>, #tpu.dimension_semantics<parallel>], iteration_bounds = array<i64: 1, 1>, scalar_prefetch = 0 : i64, scratch_operands = 0 : i64, tpu.core_type = #tpu.core_type<tc>, window_params = [{transform_indices = @transform_0, window_bounds = array<i64: 2, 256>}, {transform_indices = @transform_1, window_bounds = array<i64: 1, 256>}, {transform_indices = @transform_2, window_bounds = array<i64: 2, 256>}]} {
    %c0 = arith.constant 0 : index
    %c0_0 = arith.constant 0 : index
    %0 = vector.load %arg2[%c0, %c0_0] : memref<2x256xf32, #tpu.memory_space<vmem>>, vector<2x256xf32>
    %c0_1 = arith.constant 0 : index
    %c0_2 = arith.constant 0 : index
    %1 = vector.load %arg3[%c0_1, %c0_2] : memref<1x256xf32, #tpu.memory_space<vmem>>, vector<1x256xf32>
    %2 = vector.broadcast %1 : vector<1x256xf32> to vector<2x256xf32>
    %3 = arith.addf %0, %2 : vector<2x256xf32>
    %c0_3 = arith.constant 0 : index
    %c0_4 = arith.constant 0 : index
    %4 = vector.load %arg4[%c0_3, %c0_4] : memref<2x256xf32, #tpu.memory_space<vmem>>, vector<2x256xf32>
    tpu.vector_store %arg4[%c0_3, %c0_4], %3 {strides = array<i32>} : memref<2x256xf32, #tpu.memory_space<vmem>>, vector<2x256xf32>,
    return
  }
  func.func @transform_0(%arg0: i32, %arg1: i32) -> (i32, i32) {
    %c0_i32 = arith.constant 0 : i32
    return %arg1, %arg0 : i32, i32
  }
  func.func @transform_1(%arg0: i32, %arg1: i32) -> (i32, i32) {
    %c0_i32 = arith.constant 0 : i32
    %c0_i32_0 = arith.constant 0 : i32
    return %c0_i32, %arg0 : i32, i32
  }
  func.func @transform_2(%arg0: i32, %arg1: i32) -> (i32, i32) {
    %c0_i32 = arith.constant 0 : i32
    return %arg1, %arg0 : i32, i32
  }
}

</mosaic_0001>

<llo_original>
// kernel: tpu_custom_call.1
$region0: #{tpu_custom_call.1}
  #allocation0 [shape = 'u32[]', space=smem, size = 0x4, offset = 0x4, fixed_abs, tag = 'smem constant byte address 0x4 - core index']
  #allocation1 [shape = 'u32[144,128]{1,0:T(1,128)}', space=vmem, size = 0x12000, scoped, tag = 'internal scratch']
  %s0 = inlined_call_operand.hbm [shape: f32[2,256], index: 0, kind: input, shape index: {}]
  %s1 = inlined_call_operand.hbm [shape: f32[1,256], index: 1, kind: input, shape index: {}]
  %s2 = inlined_call_operand.hbm [shape: f32[2,256], index: 2, kind: output, shape index: {}]
  %s3 = sld [smem:[#allocation0]]
  $region26: #{tpu_custom_call.1} parent=0
    _
  %s5 = ssub.s32 1, %s3
  %s6 = scalar_select 0, %s5, %s3
  $region1: #{tpu_custom_call.1} parent=0
    #allocation2 [shape = 'u8[2048]{0}', space=vmem, size = 0x800, scoped, tag = 'input window, operand 0, single buffered']
    #allocation3 [shape = 's32[1]{0}', space=sflag, size = 0x4, scoped, tag = 'scoped memory for tpu_custom_call.1']
    #allocation4 [shape = 's32[1]{0}', space=sflag, size = 0x4, scoped, tag = 'scoped memory for tpu_custom_call.1']
    #allocation5 [shape = 'u8[1024]{0}', space=vmem, size = 0x400, scoped, tag = 'input window, operand 1, single buffered']
    #allocation6 [shape = 's32[1]{0}', space=sflag, size = 0x4, scoped, tag = 'scoped memory for tpu_custom_call.1']
    #allocation7 [shape = 'u8[2048]{0}', space=vmem, size = 0x800, scoped, tag = 'output window, operand 0, single buffered']
    %7 = vsyncpa [#allocation3], 0
    %8 = vsyncpa [#allocation6], 0
    %9 = vsyncpa [#allocation4], 0
    // Predicated region
    $region2: #{tpu_custom_call.1} parent=1 // pred_check
      _
    $region3: #{tpu_custom_call.1} parent=1 // pred_check_branch
      %11 = sbr.rel (0) target = $region5
    $region4: #{tpu_custom_call.1} parent=1 // pred_region
      %s13 = ssub.s32 64, 64
      %14 = vsyncadd [#allocation3], %s13
      %s16 = sshll.u32 [#allocation2], 4
      %s17 = int_to_ptr.vmem [resolvable:$true] %s16
      %19 = dma.hbm_to_vmem [thread:$0]  %s0, 64, %s17, [#allocation3]
    $region5: #{tpu_custom_call.1} parent=1 // pred_fallthru
      _
    // Predicated region
    $region6: #{tpu_custom_call.1} parent=1 // pred_check
      _
    $region7: #{tpu_custom_call.1} parent=1 // pred_check_branch
      %21 = sbr.rel (0) target = $region9
    $region8: #{tpu_custom_call.1} parent=1 // pred_region
      %s23 = ssub.s32 32, 32
      %24 = vsyncadd [#allocation6], %s23
      %s26 = sshll.u32 [#allocation5], 4
      %s27 = int_to_ptr.vmem [resolvable:$true] %s26
      %29 = dma.hbm_to_vmem [thread:$0]  %s1, 32, %s27, [#allocation6]
    $region9: #{tpu_custom_call.1} parent=1 // pred_fallthru
      _
    // Predicated region
    $region10: #{tpu_custom_call.1} parent=1 // pred_check
      _
    $region11: #{tpu_custom_call.1} parent=1 // pred_check_branch
      %31 = sbr.rel (0) target = $region13
    $region12: #{tpu_custom_call.1} parent=1 // pred_region
      %32 = dma.done [#allocation3], 64
    $region13: #{tpu_custom_call.1} parent=1 // pred_fallthru
      _
    // Predicated region
    $region14: #{tpu_custom_call.1} parent=1 // pred_check
      _
    $region15: #{tpu_custom_call.1} parent=1 // pred_check_branch
      %34 = sbr.rel (0) target = $region17
    $region16: #{tpu_custom_call.1} parent=1 // pred_region
      %35 = dma.done [#allocation6], 32
    $region17: #{tpu_custom_call.1} parent=1 // pred_fallthru
      _
    %v36 = vld [vmem:[#allocation2] sm:$0xf]
    %v37 = vld [vmem:[#allocation5] sm:$0x3]
    %v39 = vlaneseq
    %v40 = vshrl.u32 %v39, 7
    %v41 = vsub.s32 0, %v40
    %v42 = vrot.slane %v37, %v41
    %v43 = vlaneseq
    %v44 = vshrl.u32 %v43, 7
    %v45 = vsub.s32 1, %v44
    %v46 = vrot.slane %v37, %v45
    %v47 = vcombine.low %v42, %v46
    %v49 = vunpack.c.l.s4 1983009808
    %v50 = vunpack.c.0.s8 %v49
    %v51 = vlaneseq
    %v52 = vshrl.u32 %v51, 7
    %v53 = vsub.s32 %v50, %v52
    %v54 = vrot.slane %v47, %v53
    %v56 = vadd.f32 %v36, %v54
    %57 = vst [vmem:[#allocation7] sm:$0xf] %v56
    // Predicated region
    $region18: #{tpu_custom_call.1} parent=1 // pred_check
      _
    $region19: #{tpu_custom_call.1} parent=1 // pred_check_branch
      %59 = sbr.rel (0) target = $region21
    $region20: #{tpu_custom_call.1} parent=1 // pred_region
      %s61 = ssub.s32 64, 64
      %62 = vsyncadd [#allocation4], %s61
      %s64 = sshll.u32 [#allocation7], 4
      %s65 = int_to_ptr.vmem [resolvable:$true] %s64
      %67 = dma.vmem_to_hbm [thread:$0]  %s65, 64, %s2, [#allocation4]
    $region21: #{tpu_custom_call.1} parent=1 // pred_fallthru
      _
    // Predicated region
    $region22: #{tpu_custom_call.1} parent=1 // pred_check
      _
    $region23: #{tpu_custom_call.1} parent=1 // pred_check_branch
      %69 = sbr.rel (0) target = $region25
    $region24: #{tpu_custom_call.1} parent=1 // pred_region
      %70 = dma.done [#allocation4], 64
    $region25: #{tpu_custom_call.1} parent=1 // pred_fallthru
      _
    %71 = vsyncpa [#allocation3], 1
    %72 = vsyncpa [#allocation6], 1
    %73 = vsyncpa [#allocation4], 1

</llo_original>
